<compile_context>
chip_gen: v7x
topology: tpu7x:2x2x1
jax: 0.10.0
libtpu: 0.0.40
codegen_flags: <defaults>
</compile_context>

<pallas_src>
import functools

import numpy as np
import jax
import jax.numpy as jnp
from jax.experimental import pallas as pl
from jax.experimental.pallas import tpu as pltpu


def _round_up(x, m):
    return ((x + m - 1) // m) * m


# ---------------------------------------------------------------------------
# General path: one lane-dense GEMM  A(V,W) @ X(W, B*L), tiled along B*L.
# ---------------------------------------------------------------------------
def _nconv_gemm_kernel(a_ref, x_ref, o_ref):
    # a_ref: (Vp, W)  adjacency, constant index_map -> VMEM resident
    # x_ref: (W, TN)  lane-dense slab of the flattened input
    # o_ref: (Vp, TN) lane-dense output slab
    o_ref[...] = jnp.dot(
        a_ref[...], x_ref[...], preferred_element_type=jnp.float32
    ).astype(o_ref.dtype)


def _choose_lane_tile(BL, W, Vp, x_bytes, out_bytes, *, target_steps, tn_cap,
                      vmem_budget_bytes):
    """Adaptive lane tile: aim for >= target_steps grid steps, stay in VMEM."""
    if BL < 128:
        return BL  # full-dim lane block (always legal), single grid step
    # Double-buffered x slab + out slab per lane column, plus resident A.
    per_col = 2 * (W * x_bytes + Vp * out_bytes)
    tn_budget = (vmem_budget_bytes - Vp * W * x_bytes) // per_col
    tn_budget = max(128, (tn_budget // 128) * 128)
    tn = _round_up(pl.cdiv(BL, target_steps), 128)
    return max(128, min(tn, tn_cap, tn_budget))


def _nconv_gemm(x, A, *, compute_dtype, out_dtype, target_steps, tn_cap,
                vmem_budget_bytes):
    N, C, W, L = x.shape
    V = A.shape[0]
    BL = N * C * L

    x_bytes = np.dtype(compute_dtype).itemsize
    out_bytes = np.dtype(out_dtype).itemsize
    sublane = 16 if x_bytes == 2 else 8
    Vp = _round_up(V, sublane)

    # Cast BEFORE the transpose: the relayout pass writes compute_dtype-width
    # elements.  W is deliberately NOT padded (full-dim block rule), so no
    # extra HBM pad pass over x is needed.
    x2 = jnp.transpose(x.astype(compute_dtype), (2, 0, 1, 3)).reshape(W, BL)
    A_p = jnp.pad(A.astype(compute_dtype), ((0, Vp - V), (0, 0)))

    TN = _choose_lane_tile(BL, W, Vp, x_bytes, out_bytes,
                           target_steps=target_steps, tn_cap=tn_cap,
                           vmem_budget_bytes=vmem_budget_bytes)
    grid = (pl.cdiv(BL, TN),)  # ragged last block: no padded copy of x needed

    flops = 2 * V * W * BL
    bytes_accessed = W * BL * x_bytes + Vp * W * x_bytes + Vp * BL * out_bytes

    out_p = pl.pallas_call(
        _nconv_gemm_kernel,
        out_shape=jax.ShapeDtypeStruct((Vp, BL), out_dtype),
        grid_spec=pltpu.PrefetchScalarGridSpec(
            num_scalar_prefetch=0,
            grid=grid,
            in_specs=[
                pl.BlockSpec((Vp, W), lambda j: (0, 0)),   # A: resident, tiny
                pl.BlockSpec((W, TN), lambda j: (0, j)),   # x: streamed slabs
            ],
            out_specs=pl.BlockSpec((Vp, TN), lambda j: (0, j)),
        ),
        compiler_params=pltpu.CompilerParams(
            dimension_semantics=("parallel",),
        ),
        cost_estimate=pl.CostEstimate(
            flops=flops, transcendentals=0, bytes_accessed=bytes_accessed),
    )(A_p, x2)

    # TODO(synk): for L < 128 the epilogue relayout back to NCVL remains a
    # separate XLA pass; folding it into the kernel needs lane-splitting
    # relayouts that are not worth the compile risk here.
    return out_p[:V].reshape(V, N, C, L).transpose(1, 2, 0, 3)


# ---------------------------------------------------------------------------
# Fast path (L % 128 == 0): write output directly in (B, V, L) layout.
# ---------------------------------------------------------------------------
def _nconv_direct_kernel(a_ref, x_ref, o_ref):
    # a_ref: (V, W) resident; x_ref: (TB, W, L); o_ref: (TB, V, L)
    a = a_ref[...]
    for b in range(x_ref.shape[0]):  # static, small unroll
        xb = x_ref[b].astype(a.dtype)
        o_ref[b] = jnp.dot(
            a, xb, preferred_element_type=jnp.float32).astype(o_ref.dtype)


def _nconv_direct(x, A, *, compute_dtype, out_dtype, target_steps, tb_cap,
                  vmem_budget_bytes):
    N, C, W, L = x.shape
    V = A.shape[0]
    B = N * C

    A_c = A.astype(compute_dtype)
    x3 = x.reshape(B, W, L)  # free: merges leading dims, no HBM pass

    x_bytes = x.dtype.itemsize
    out_bytes = np.dtype(out_dtype).itemsize
    per_b = 2 * (W * L * x_bytes + V * L * out_bytes)  # double-buffered
    tb_budget = max(1, (vmem_budget_bytes - V * W * A_c.dtype.itemsize) // per_b)
    TB = max(1, min(pl.cdiv(B, target_steps), tb_cap, tb_budget, B))
    grid = (pl.cdiv(B, TB),)

    flops = 2 * V * W * B * L
    bytes_accessed = (B * W * L * x_bytes + V * W * A_c.dtype.itemsize
                      + B * V * L * out_bytes)

    out3 = pl.pallas_call(
        _nconv_direct_kernel,
        out_shape=jax.ShapeDtypeStruct((B, V, L), out_dtype),
        grid_spec=pltpu.PrefetchScalarGridSpec(
            num_scalar_prefetch=0,
            grid=grid,
            in_specs=[
                pl.BlockSpec((V, W), lambda i: (0, 0)),        # A resident
                pl.BlockSpec((TB, W, L), lambda i: (i, 0, 0)),  # x batch slab
            ],
            out_specs=pl.BlockSpec((TB, V, L), lambda i: (i, 0, 0)),
        ),
        compiler_params=pltpu.CompilerParams(
            dimension_semantics=("parallel",),
        ),
        cost_estimate=pl.CostEstimate(
            flops=flops, transcendentals=0, bytes_accessed=bytes_accessed),
    )(A_c, x3)

    return out3.reshape(N, C, V, L)  # free


# ---------------------------------------------------------------------------
# Public entry point
# ---------------------------------------------------------------------------
def nconv(x, A, *, compute_dtype=jnp.bfloat16, out_dtype=None,
          target_steps=16, tn_cap=16384, tb_cap=32,
          vmem_budget_bytes=24 * 1024 * 1024):
    """einsum('ncwl,vw->ncvl'): x (N,C,W,L), A (V,W) -> (N,C,V,L).

    compute_dtype: MXU operand dtype (bf16 default, f32 accumulation); pass
      jnp.float32 if this feeds training and full precision is required.
    out_dtype: output dtype (default: x.dtype, matching the PyTorch module).
    """
    N, C, W, L = x.shape
    V, W2 = A.shape
    assert W == W2, "A's second dim must match x's 'w' dim"
    if out_dtype is None:
        out_dtype = x.dtype

    if L % 128 == 0 and L > 0:
        return _nconv_direct(x, A, compute_dtype=compute_dtype,
                             out_dtype=out_dtype, target_steps=target_steps,
                             tb_cap=tb_cap,
                             vmem_budget_bytes=vmem_budget_bytes)
    return _nconv_gemm(x, A, compute_dtype=compute_dtype, out_dtype=out_dtype,
                       target_steps=target_steps, tn_cap=tn_cap,
                       vmem_budget_bytes=vmem_budget_bytes)


def _bf16_ref(x, A):
    xq = x.astype(jnp.bfloat16).astype(jnp.float32)
    Aq = A.astype(jnp.bfloat16).astype(jnp.float32)
    return jnp.einsum('ncwl,vw->ncvl', xq, Aq,
                      precision=jax.lax.Precision.HIGHEST)


if __name__ == "__main__":
    key = jax.random.PRNGKey(0)
    k1, k2, k3, k4, k5, k6 = jax.random.split(key, 6)

    # Case 1: MTGNN-like toy shapes (general GEMM path, single full-dim block).
    N, C, W, L, V = 2, 4, 16, 8, 16
    x = jax.random.normal(k1, (N, C, W, L), dtype=jnp.float32)
    A = jax.random.normal(k2, (V, W), dtype=jnp.float32)
    out = jax.jit(nconv)(x, A)
    jax.block_until_ready(out)
    ref = _bf16_ref(x, A)
    assert out.shape == (N, C, V, L) and out.dtype == x.dtype
    assert jnp.allclose(out, ref, atol=2e-3, rtol=2e-3)

    # Case 2: odd sizes -> multi-step grid with a ragged last lane block
    # (exercises the no-pad tail handling) and a padded V.
    N, C, W, L, V = 2, 3, 20, 24, 12
    x = jax.random.normal(k3, (N, C, W, L), dtype=jnp.float32)
    A = jax.random.normal(k4, (V, W), dtype=jnp.float32)
    out = jax.jit(functools.partial(nconv, tn_cap=128))(x, A)
    jax.block_until_ready(out)
    ref = _bf16_ref(x, A)
    assert out.shape == (N, C, V, L)
    assert jnp.allclose(out, ref, atol=3e-3, rtol=3e-3)

    # Case 3: lane-dense L -> direct path, no wrapper layout passes.
    N, C, W, L, V = 2, 2, 16, 128, 16
    x = jax.random.normal(k5, (N, C, W, L), dtype=jnp.float32)
    A = jax.random.normal(k6, (V, W), dtype=jnp.float32)
    out = jax.jit(nconv)(x, A)
    jax.block_until_ready(out)
    ref = _bf16_ref(x, A)
    assert out.shape == (N, C, V, L)
    assert jnp.allclose(out, ref, atol=2e-3, rtol=2e-3)

    print("KERNEL_OK")
</pallas_src>

<mosaic_0001>
module attributes {stable_mosaic.version = 11 : i64} {
  func.func @_nconv_gemm_kernel(%arg0: i32, %arg1: memref<16x16xbf16, #tpu.memory_space<vmem>>, %arg2: memref<16x64xbf16, #tpu.memory_space<vmem>>, %arg3: memref<16x64xf32, #tpu.memory_space<vmem>>) attributes {dimension_semantics = [#tpu.dimension_semantics<parallel>], iteration_bounds = array<i64: 1>, scalar_prefetch = 0 : i64, scratch_operands = 0 : i64, tpu.core_type = #tpu.core_type<tc>, window_params = [{pipeline_mode = #tpu.pipeline_mode<synchronous>, transform_indices = @transform_0, window_bounds = array<i64: 16, 16>}, {transform_indices = @transform_1, window_bounds = array<i64: 16, 64>}, {transform_indices = @transform_2, window_bounds = array<i64: 16, 64>}]} {
    %c0 = arith.constant 0 : index
    %c0_0 = arith.constant 0 : index
    %0 = vector.load %arg1[%c0, %c0_0] : memref<16x16xbf16, #tpu.memory_space<vmem>>, vector<16x16xbf16>
    %c0_1 = arith.constant 0 : index
    %c0_2 = arith.constant 0 : index
    %1 = vector.load %arg2[%c0_1, %c0_2] : memref<16x64xbf16, #tpu.memory_space<vmem>>, vector<16x64xbf16>
    %cst = arith.constant dense<0.000000e+00> : vector<16x64xf32>
    %2 = tpu.matmul %0, %1, %cst {dimension_numbers = #tpu.dot_dimension_numbers<[1], [0], [0], [1], [0, 0, 1, 1], [], []>} : vector<16x16xbf16>, vector<16x64xbf16>, vector<16x64xf32> -> vector<16x64xf32>
    %c0_3 = arith.constant 0 : index
    %c0_4 = arith.constant 0 : index
    %3 = vector.load %arg3[%c0_3, %c0_4] : memref<16x64xf32, #tpu.memory_space<vmem>>, vector<16x64xf32>
    tpu.vector_store %arg3[%c0_3, %c0_4], %2 {strides = array<i32>} : memref<16x64xf32, #tpu.memory_space<vmem>>, vector<16x64xf32>,
    return
  }
  func.func @transform_0(%arg0: i32) -> (i32, i32) {
    %c0_i32 = arith.constant 0 : i32
    %c0_i32_0 = arith.constant 0 : i32
    %c0_i32_1 = arith.constant 0 : i32
    return %c0_i32, %c0_i32_0 : i32, i32
  }
  func.func @transform_1(%arg0: i32) -> (i32, i32) {
    %c0_i32 = arith.constant 0 : i32
    %c0_i32_0 = arith.constant 0 : i32
    return %c0_i32, %arg0 : i32, i32
  }
  func.func @transform_2(%arg0: i32) -> (i32, i32) {
    %c0_i32 = arith.constant 0 : i32
    %c0_i32_0 = arith.constant 0 : i32
    return %c0_i32, %arg0 : i32, i32
  }
}

</mosaic_0001>

<llo_original>
// kernel: nconv.1
$region0: #{nconv.1}
  #allocation0 [shape = 'u32[]', space=smem, size = 0x4, offset = 0x4, fixed_abs, tag = 'smem constant byte address 0x4 - core index']
  #allocation1 [shape = 'u32[144,128]{1,0:T(1,128)}', space=vmem, size = 0x12000, scoped, tag = 'internal scratch']
  %s0 = inlined_call_operand.vmem [shape: bf16[16,16], index: 0, kind: input, shape index: {}]
  %s1 = inlined_call_operand.vmem [shape: bf16[16,64], index: 1, kind: input, shape index: {}]
  %s2 = inlined_call_operand.vmem [shape: f32[16,64], index: 2, kind: output, shape index: {}]
  %s3 = sld [smem:[#allocation0]]
  $region18: #{nconv.1} parent=0
    _
  %s5 = ssub.s32 1, %s3
  %s6 = scalar_select 0, %s5, %s3
  // Predicated region
  $region2: #{nconv.1} parent=0 // pred_check
    _
  $region3: #{nconv.1} parent=0 // pred_check_branch
    %8 = sbr.rel (0) target = $region5
  $region4: #{nconv.1} parent=0 // pred_region
    _
  $region5: #{nconv.1} parent=0 // pred_fallthru
    _
  // Predicated region
  $region6: #{nconv.1} parent=0 // pred_check
    _
  $region7: #{nconv.1} parent=0 // pred_check_branch
    %10 = sbr.rel (0) target = $region9
  $region8: #{nconv.1} parent=0 // pred_region
    _
  $region9: #{nconv.1} parent=0 // pred_fallthru
    _
  %v12 = vld [vmem:[%s0] sm:$0xf]
  %v13 = vld [vmem:[%s0 + $0x4] sm:$0xf]
  %v14 = vld [vmem:[%s1] sm:$0xf]
  %v15 = vld [vmem:[%s1 + $0x4] sm:$0xf]
  %v18 = vunpack.c.l.b16 %v12
  %v19 = vunpack.c.l.b16 %v13
  %v20 = vpack.c.b16 %v19, %v18
  %v23 = vunpack.c.l.b16 %v14
  %v24 = vunpack.c.l.b16 %v15
  %v25 = vpack.c.b16 %v24, %v23
  %vm27 = vcmask 130048
  %v29 = vsel %vm27, %v20, 0
  %31 = vmatprep.subr.bf16.mxu0 0
  %32 = vmatpush1.bf16.msra.mxu0 %v25
  %33 = vmatprep.subr.bf16.mxu0 0
  %34 = vmatpush1.bf16.msra.mxu0 0
  %35 = vmatprep.subr.bf16.mxu0 0
  %36 = vmatpush1.bf16.msra.mxu0 0
  %37 = vmatprep.subr.bf16.mxu0 0
  %38 = vmatpush1.bf16.msra.mxu0 0
  %39 = vmatprep.subr.bf16.mxu0 0
  %40 = vmatpush1.bf16.msra.mxu0 0
  %41 = vmatprep.subr.bf16.mxu0 0
  %42 = vmatpush1.bf16.msra.mxu0 0
  %43 = vmatprep.subr.bf16.mxu0 0
  %44 = vmatpush1.bf16.msra.mxu0 0
  %45 = vmatprep.subr.bf16.mxu0 0
  %46 = vmatpush1.bf16.msra.mxu0 0
  %47 = vmatprep.subr.bf16.mxu0 0
  %48 = vmatpush1.bf16.msra.mxu0 0
  %49 = vmatprep.subr.bf16.mxu0 0
  %50 = vmatpush1.bf16.msra.mxu0 0
  %51 = vmatprep.subr.bf16.mxu0 0
  %52 = vmatpush1.bf16.msra.mxu0 0
  %53 = vmatprep.subr.bf16.mxu0 0
  %54 = vmatpush1.bf16.msra.mxu0 0
  %55 = vmatprep.subr.bf16.mxu0 0
  %56 = vmatpush1.bf16.msra.mxu0 0
  %57 = vmatprep.subr.bf16.mxu0 0
  %58 = vmatpush1.bf16.msra.mxu0 0
  %59 = vmatprep.subr.bf16.mxu0 0
  %60 = vmatpush1.bf16.msra.mxu0 0
  %61 = vmatprep.subr.bf16.mxu0 0
  %62 = vmatpush1.bf16.msra.mxu0 0
  %63 = vmatprep.mubr.bf16.mxu0 0
  %64 = vmatmul.mubr.bf16.gmra.mrb[0].mxu0 %v29
  %v65 = vpop.f32.mrb[0].mxu0
  %v66 = vadd.f32 0.0, %v65
  %v67 = vpop.f32.mrb[0].mxu0
  %v68 = vpop.f32.mrb[0].mxu0
  %v69 = vadd.f32 0.0, %v68
  %v70 = vpop.f32.mrb[0].mxu0
  %71 = vdwg.mxu0
  %vm72 = vcmask 523264
  %73 = vst.msk [vmem:[%s2] sm:$0xff] %vm72, %v66
  %74 = vst.msk [vmem:[%s2 + $0x8] sm:$0xff] %vm72, %v69
  // Predicated region
  $region10: #{nconv.1} parent=0 // pred_check
    _
  $region11: #{nconv.1} parent=0 // pred_check_branch
    %76 = sbr.rel (0) target = $region13
  $region12: #{nconv.1} parent=0 // pred_region
    _
  $region13: #{nconv.1} parent=0 // pred_fallthru
    _
  // Predicated region
  $region14: #{nconv.1} parent=0 // pred_check
    _
  $region15: #{nconv.1} parent=0 // pred_check_branch
    %78 = sbr.rel (0) target = $region17
  $region16: #{nconv.1} parent=0 // pred_region
    _
  $region17: #{nconv.1} parent=0 // pred_fallthru
    _

</llo_original>
